<compile_context>
chip_gen: v6e
topology: v6e:2x2x1
jax: 0.10.0
libtpu: 0.0.40
codegen_flags: <defaults>
</compile_context>

<pallas_src>
import functools

import jax
import jax.numpy as jnp
from jax.experimental import pallas as pl
from jax.experimental.pallas import tpu as pltpu


def _round_up(n: int, m: int) -> int:
    return -(-n // m) * m


def _tpu_caps():
    """Return (tensorcores_per_chip, max batch-columns per block) for the current backend."""
    kind = ""
    try:
        kind = jax.devices()[0].device_kind.lower()
    except Exception:
        pass
    if "v7" in kind:
        # 2 TCs/chip; 64 MiB physical VMEM (32 MiB scoped default) -> 32K columns is safe.
        return 2, 32 * 1024
    if "v5 lite" in kind or "v5e" in kind or "v5litepod" in kind:
        # 1 TC; 16 MiB scoped-VMEM default -> keep the per-block working set ~7 MiB.
        return 1, 16 * 1024
    # v6e and anything unknown: 1 TC, 32 MiB scoped default.
    return 1, 32 * 1024


def _pick_block_b(batch: int, n_tc: int, max_block: int) -> int:
    """Big blocks (amortize grid-step overhead); on multi-TC chips keep a multiple of n_tc blocks."""
    b128 = _round_up(max(batch, 1), 128)
    if n_tc > 1:
        n_blocks = n_tc * max(1, -(-b128 // (n_tc * max_block)))
    else:
        n_blocks = max(1, -(-b128 // max_block))
    return _round_up(-(-b128 // n_blocks), 128)


def mlp_kernel(x_ref, w1_ref, b1_ref, w2_ref, b2_ref, w3_ref, b3_ref, o_ref):
    # x_ref: (in_dim, tb)  w1: (F, in_dim)  b1: (F, 1)
    # w2: (F, F)  b2: (F, 1)   w3: (C, F)  b3: (C, 1)   o_ref: (C, tb)
    x = x_ref[...].astype(jnp.float32)                 # (in_dim, tb); cast supports bf16 I/O
    w1 = w1_ref[...].astype(jnp.float32)               # (F, in_dim)

    # Layer 1: tiny-K contraction on the VPU (broadcast multiply-adds), not the MXU.
    in_dim = x_ref.shape[0]
    h1 = jnp.broadcast_to(b1_ref[...], (w1.shape[0], x.shape[1]))
    for k in range(in_dim):                             # static, in_dim == 2 for this model
        h1 = h1 + w1[:, k:k + 1] * x[k:k + 1, :]
    h1 = jnp.maximum(h1, 0.0)                           # (F, tb)

    # Layer 2: MXU matmul, f32 accumulation.
    h2 = jnp.dot(w2_ref[...], h1, preferred_element_type=jnp.float32) + b2_ref[...]
    h2 = jnp.maximum(h2, 0.0)                           # (F, tb)

    # Layer 3 + sigmoid; output tile is lane-dense (C, tb).
    logits = jnp.dot(w3_ref[...], h2, preferred_element_type=jnp.float32) + b3_ref[...]
    # Exact sigmoid kept for parity with the reference (approx-EUP logistic is a micro-win only).
    o_ref[...] = jax.nn.sigmoid(logits).astype(o_ref.dtype)


@functools.partial(jax.jit, static_argnames=("block_b", "lane_major_output"))
def _forward_jit(x, params, block_b, lane_major_output):
    w1, b1, w2, b2, w3, b3 = params
    B, in_dim = x.shape
    F = w1.shape[0]
    C = w3.shape[0]

    n_blocks = pl.cdiv(B, block_b)
    B_pad = n_blocks * block_b

    # Layout plumbing inside the same jit as the kernel so XLA fuses it into one dispatch.
    # Padded tail columns just propagate biases through ReLUs (harmless) and are sliced off.
    x_t = jnp.pad(x.T, ((0, 0), (0, B_pad - B)))        # (in_dim, B_pad), batch in lanes

    out_t = pl.pallas_call(
        mlp_kernel,
        out_shape=jax.ShapeDtypeStruct((C, B_pad), x.dtype),
        grid_spec=pltpu.PrefetchScalarGridSpec(
            num_scalar_prefetch=0,
            grid=(n_blocks,),
            in_specs=[
                pl.BlockSpec((in_dim, block_b), lambda i: (0, i)),  # x tile, batch in lanes
                pl.BlockSpec((F, in_dim), lambda i: (0, 0)),        # w1 (VMEM-resident)
                pl.BlockSpec((F, 1), lambda i: (0, 0)),             # b1
                pl.BlockSpec((F, F), lambda i: (0, 0)),             # w2
                pl.BlockSpec((F, 1), lambda i: (0, 0)),             # b2
                pl.BlockSpec((C, F), lambda i: (0, 0)),             # w3
                pl.BlockSpec((C, 1), lambda i: (0, 0)),             # b3
            ],
            out_specs=pl.BlockSpec((C, block_b), lambda i: (0, i)),
        ),
        compiler_params=pltpu.CompilerParams(
            dimension_semantics=("parallel",),          # shards batch blocks across TCs on v7x
        ),
    )(x_t, w1, b1, w2, b2, w3, b3)

    out_t = out_t[:, :B]                                # drop pad columns (fused slice)
    if lane_major_output:
        return out_t                                    # (C, B): skip the output transpose
    return out_t.T                                      # (B, C) PyTorch-parity layout


def model_bilinear_forward(x, params, *, block_b=None, lane_major_output=False):
    """Forward pass of ModelBilinear.

    x: (B, in_dim) f32 (or bf16 for halved I/O bytes on large batches).
    params: PyTorch-native weights (out_features, in_features) and column biases (out, 1).
    Returns (B, C), or (C, B) lane-major if lane_major_output=True (no transpose kernel).
    """
    w1 = params[0]
    B, in_dim = x.shape
    assert in_dim == w1.shape[1], (
        f"x has in_dim={in_dim} but fc1 expects {w1.shape[1]} input features")

    if block_b is None:
        n_tc, max_block = _tpu_caps()
        block_b = _pick_block_b(B, n_tc, max_block)
    block_b = max(128, _round_up(block_b, 128))         # lane-dense multiple of 128

    return _forward_jit(x, tuple(params), block_b, lane_major_output)


def init_params(key, features, num_output_classes, in_dim=2):
    # Deterministic init mimicking nn.Linear's uniform(-1/sqrt(fan_in), 1/sqrt(fan_in)).
    # Weights kept PyTorch-native (fan_out, fan_in); biases as (fan_out, 1) columns.
    keys = jax.random.split(key, 6)

    def linear(kw, kb, fan_in, fan_out):
        bound = 1.0 / jnp.sqrt(fan_in)
        w = jax.random.uniform(kw, (fan_out, fan_in), jnp.float32, -bound, bound)
        b = jax.random.uniform(kb, (fan_out, 1), jnp.float32, -bound, bound)
        return w, b

    w1, b1 = linear(keys[0], keys[1], in_dim, features)
    w2, b2 = linear(keys[2], keys[3], features, features)
    w3, b3 = linear(keys[4], keys[5], features, num_output_classes)
    return (w1, b1, w2, b2, w3, b3)


def reference_forward(x, params):
    w1, b1, w2, b2, w3, b3 = params
    h = jnp.maximum(x @ w1.T + b1.T, 0.0)
    h = jnp.maximum(h @ w2.T + b2.T, 0.0)
    return jax.nn.sigmoid(h @ w3.T + b3.T)


if __name__ == "__main__":
    features = 32
    num_output_classes = 4

    key = jax.random.PRNGKey(0)
    k_x, k_p = jax.random.split(key)
    params = init_params(k_p, features, num_output_classes)

    # Case 1: lane-aligned toy batch ("two moons"-style 2-D points).
    batch = 128
    x = jax.random.normal(k_x, (batch, 2), dtype=jnp.float32)
    out = jax.block_until_ready(model_bilinear_forward(x, params))
    ref = reference_forward(x, params)
    assert out.shape == (batch, num_output_classes)
    assert jnp.allclose(out, ref, atol=1e-5, rtol=1e-5), "mismatch vs pure-JAX reference (B=128)"

    # Case 2: non-multiple-of-128 batch exercises the pad/slice path.
    batch2 = 200
    x2 = jax.random.normal(jax.random.PRNGKey(1), (batch2, 2), dtype=jnp.float32)
    out2 = jax.block_until_ready(model_bilinear_forward(x2, params))
    ref2 = reference_forward(x2, params)
    assert out2.shape == (batch2, num_output_classes)
    assert jnp.allclose(out2, ref2, atol=1e-5, rtol=1e-5), "mismatch vs reference (B=200, padded)"

    # Case 3: lane-major output path (no final transpose) for fused downstream consumers.
    out3 = jax.block_until_ready(model_bilinear_forward(x, params, lane_major_output=True))
    assert out3.shape == (num_output_classes, batch)
    assert jnp.allclose(out3.T, ref, atol=1e-5, rtol=1e-5), "mismatch vs reference (lane-major)"

    print("KERNEL_OK")
</pallas_src>

<mosaic_0001>
module attributes {stable_mosaic.version = 11 : i64} {
  func.func @mlp_kernel(%arg0: i32, %arg1: memref<2x128xf32, #tpu.memory_space<vmem>>, %arg2: memref<32x2xf32, #tpu.memory_space<vmem>>, %arg3: memref<32x1xf32, #tpu.memory_space<vmem>>, %arg4: memref<32x32xf32, #tpu.memory_space<vmem>>, %arg5: memref<32x1xf32, #tpu.memory_space<vmem>>, %arg6: memref<4x32xf32, #tpu.memory_space<vmem>>, %arg7: memref<4x1xf32, #tpu.memory_space<vmem>>, %arg8: memref<4x128xf32, #tpu.memory_space<vmem>>) attributes {dimension_semantics = [#tpu.dimension_semantics<parallel>], iteration_bounds = array<i64: 1>, scalar_prefetch = 0 : i64, scratch_operands = 0 : i64, tpu.core_type = #tpu.core_type<tc>, window_params = [{transform_indices = @transform_0, window_bounds = array<i64: 2, 128>}, {pipeline_mode = #tpu.pipeline_mode<synchronous>, transform_indices = @transform_1, window_bounds = array<i64: 32, 2>}, {pipeline_mode = #tpu.pipeline_mode<synchronous>, transform_indices = @transform_2, window_bounds = array<i64: 32, 1>}, {pipeline_mode = #tpu.pipeline_mode<synchronous>, transform_indices = @transform_3, window_bounds = array<i64: 32, 32>}, {pipeline_mode = #tpu.pipeline_mode<synchronous>, transform_indices = @transform_4, window_bounds = array<i64: 32, 1>}, {pipeline_mode = #tpu.pipeline_mode<synchronous>, transform_indices = @transform_5, window_bounds = array<i64: 4, 32>}, {pipeline_mode = #tpu.pipeline_mode<synchronous>, transform_indices = @transform_6, window_bounds = array<i64: 4, 1>}, {transform_indices = @transform_7, window_bounds = array<i64: 4, 128>}]} {
    %c0 = arith.constant 0 : index
    %c0_0 = arith.constant 0 : index
    %0 = vector.load %arg1[%c0, %c0_0] : memref<2x128xf32, #tpu.memory_space<vmem>>, vector<2x128xf32>
    %c0_1 = arith.constant 0 : index
    %c0_2 = arith.constant 0 : index
    %1 = vector.load %arg2[%c0_1, %c0_2] : memref<32x2xf32, #tpu.memory_space<vmem>>, vector<32x2xf32>
    %c0_3 = arith.constant 0 : index
    %c0_4 = arith.constant 0 : index
    %2 = vector.load %arg3[%c0_3, %c0_4] : memref<32x1xf32, #tpu.memory_space<vmem>>, vector<32x1xf32>
    %3 = vector.shape_cast %2 : vector<32x1xf32> to vector<32x1xf32>
    %4 = vector.broadcast %3 : vector<32x1xf32> to vector<32x128xf32>
    %5 = vector.extract_strided_slice %1 {offsets = [0, 0], sizes = [32, 1], strides = [1, 1]} : vector<32x2xf32> to vector<32x1xf32>
    %6 = vector.extract_strided_slice %0 {offsets = [0, 0], sizes = [1, 128], strides = [1, 1]} : vector<2x128xf32> to vector<1x128xf32>
    %7 = vector.broadcast %5 : vector<32x1xf32> to vector<32x128xf32>
    %8 = vector.broadcast %6 : vector<1x128xf32> to vector<32x128xf32>
    %9 = arith.mulf %7, %8 : vector<32x128xf32>
    %10 = arith.addf %4, %9 : vector<32x128xf32>
    %11 = vector.extract_strided_slice %1 {offsets = [0, 1], sizes = [32, 1], strides = [1, 1]} : vector<32x2xf32> to vector<32x1xf32>
    %12 = vector.extract_strided_slice %0 {offsets = [1, 0], sizes = [1, 128], strides = [1, 1]} : vector<2x128xf32> to vector<1x128xf32>
    %13 = vector.broadcast %11 : vector<32x1xf32> to vector<32x128xf32>
    %14 = vector.broadcast %12 : vector<1x128xf32> to vector<32x128xf32>
    %15 = arith.mulf %13, %14 : vector<32x128xf32>
    %16 = arith.addf %10, %15 : vector<32x128xf32>
    %cst = arith.constant 0.000000e+00 : f32
    %17 = vector.broadcast %cst : f32 to vector<32x128xf32>
    %18 = arith.maximumf %16, %17 : vector<32x128xf32>
    %c0_5 = arith.constant 0 : index
    %c0_6 = arith.constant 0 : index
    %19 = vector.load %arg4[%c0_5, %c0_6] : memref<32x32xf32, #tpu.memory_space<vmem>>, vector<32x32xf32>
    %cst_7 = arith.constant dense<0.000000e+00> : vector<32x128xf32>
    %20 = tpu.matmul %19, %18, %cst_7 {dimension_numbers = #tpu.dot_dimension_numbers<[1], [0], [0], [1], [0, 0, 1, 1], [], []>} : vector<32x32xf32>, vector<32x128xf32>, vector<32x128xf32> -> vector<32x128xf32>
    %c0_8 = arith.constant 0 : index
    %c0_9 = arith.constant 0 : index
    %21 = vector.load %arg5[%c0_8, %c0_9] : memref<32x1xf32, #tpu.memory_space<vmem>>, vector<32x1xf32>
    %22 = vector.broadcast %21 : vector<32x1xf32> to vector<32x128xf32>
    %23 = arith.addf %20, %22 : vector<32x128xf32>
    %cst_10 = arith.constant 0.000000e+00 : f32
    %24 = vector.broadcast %cst_10 : f32 to vector<32x128xf32>
    %25 = arith.maximumf %23, %24 : vector<32x128xf32>
    %c0_11 = arith.constant 0 : index
    %c0_12 = arith.constant 0 : index
    %26 = vector.load %arg6[%c0_11, %c0_12] : memref<4x32xf32, #tpu.memory_space<vmem>>, vector<4x32xf32>
    %cst_13 = arith.constant dense<0.000000e+00> : vector<4x128xf32>
    %27 = tpu.matmul %26, %25, %cst_13 {dimension_numbers = #tpu.dot_dimension_numbers<[1], [0], [0], [1], [0, 0, 1, 1], [], []>} : vector<4x32xf32>, vector<32x128xf32>, vector<4x128xf32> -> vector<4x128xf32>
    %c0_14 = arith.constant 0 : index
    %c0_15 = arith.constant 0 : index
    %28 = vector.load %arg7[%c0_14, %c0_15] : memref<4x1xf32, #tpu.memory_space<vmem>>, vector<4x1xf32>
    %29 = vector.broadcast %28 : vector<4x1xf32> to vector<4x128xf32>
    %30 = arith.addf %27, %29 : vector<4x128xf32>
    %31 = arith.negf %30 : vector<4x128xf32>
    %32 = math.exp %31 : vector<4x128xf32>
    %cst_16 = arith.constant 1.000000e+00 : f32
    %33 = vector.broadcast %cst_16 : f32 to vector<4x128xf32>
    %34 = arith.addf %33, %32 : vector<4x128xf32>
    %35 = arith.divf %33, %34 : vector<4x128xf32>
    %c0_17 = arith.constant 0 : index
    %c0_18 = arith.constant 0 : index
    %36 = vector.load %arg8[%c0_17, %c0_18] : memref<4x128xf32, #tpu.memory_space<vmem>>, vector<4x128xf32>
    tpu.vector_store %arg8[%c0_17, %c0_18], %35 {strides = array<i32>} : memref<4x128xf32, #tpu.memory_space<vmem>>, vector<4x128xf32>,
    return
  }
  func.func @transform_0(%arg0: i32) -> (i32, i32) {
    %c0_i32 = arith.constant 0 : i32
    %c0_i32_0 = arith.constant 0 : i32
    return %c0_i32, %arg0 : i32, i32
  }
  func.func @transform_1(%arg0: i32) -> (i32, i32) {
    %c0_i32 = arith.constant 0 : i32
    %c0_i32_0 = arith.constant 0 : i32
    %c0_i32_1 = arith.constant 0 : i32
    return %c0_i32, %c0_i32_0 : i32, i32
  }
  func.func @transform_2(%arg0: i32) -> (i32, i32) {
    %c0_i32 = arith.constant 0 : i32
    %c0_i32_0 = arith.constant 0 : i32
    %c0_i32_1 = arith.constant 0 : i32
    return %c0_i32, %c0_i32_0 : i32, i32
  }
  func.func @transform_3(%arg0: i32) -> (i32, i32) {
    %c0_i32 = arith.constant 0 : i32
    %c0_i32_0 = arith.constant 0 : i32
    %c0_i32_1 = arith.constant 0 : i32
    return %c0_i32, %c0_i32_0 : i32, i32
  }
  func.func @transform_4(%arg0: i32) -> (i32, i32) {
    %c0_i32 = arith.constant 0 : i32
    %c0_i32_0 = arith.constant 0 : i32
    %c0_i32_1 = arith.constant 0 : i32
    return %c0_i32, %c0_i32_0 : i32, i32
  }
  func.func @transform_5(%arg0: i32) -> (i32, i32) {
    %c0_i32 = arith.constant 0 : i32
    %c0_i32_0 = arith.constant 0 : i32
    %c0_i32_1 = arith.constant 0 : i32
    return %c0_i32, %c0_i32_0 : i32, i32
  }
  func.func @transform_6(%arg0: i32) -> (i32, i32) {
    %c0_i32 = arith.constant 0 : i32
    %c0_i32_0 = arith.constant 0 : i32
    %c0_i32_1 = arith.constant 0 : i32
    return %c0_i32, %c0_i32_0 : i32, i32
  }
  func.func @transform_7(%arg0: i32) -> (i32, i32) {
    %c0_i32 = arith.constant 0 : i32
    %c0_i32_0 = arith.constant 0 : i32
    return %c0_i32, %arg0 : i32, i32
  }
}

</mosaic_0001>

<llo_original>
// kernel: _forward_jit.1
$region0: #{_forward_jit.1}
  #allocation0 [shape = 'u32[]', space=smem, size = 0x4, offset = 0x4, fixed_abs, tag = 'smem constant byte address 0x4 - core index']
  #allocation1 [shape = 'u32[144,128]{1,0:T(1,128)}', space=vmem, size = 0x12000, scoped, tag = 'internal scratch']
  %s0 = inlined_call_operand.vmem [shape: f32[2,128], index: 0, kind: input, shape index: {}]
  %s1 = inlined_call_operand.vmem [shape: f32[32,2], index: 1, kind: input, shape index: {}]
  %s2 = inlined_call_operand.vmem [shape: f32[32,1], index: 2, kind: input, shape index: {}]
  %s3 = inlined_call_operand.vmem [shape: f32[32,32], index: 3, kind: input, shape index: {}]
  %s4 = inlined_call_operand.vmem [shape: f32[32,1], index: 4, kind: input, shape index: {}]
  %s5 = inlined_call_operand.vmem [shape: f32[4,32], index: 5, kind: input, shape index: {}]
  %s6 = inlined_call_operand.vmem [shape: f32[4,1], index: 6, kind: input, shape index: {}]
  %s7 = inlined_call_operand.hbm [shape: f32[4,128], index: 7, kind: output, shape index: {}]
  %s8 = sld [smem:[#allocation0]]
  $region38: #{_forward_jit.1} parent=0
    _
  %s10 = ssub.s32 1, %s8
  %s11 = scalar_select 0, %s10, %s8
  $region1: #{_forward_jit.1} parent=0
    #allocation2 [shape = 'u8[2048]{0}', space=vmem, size = 0x800, scoped, tag = 'output window, operand 0, single buffered']
    #allocation3 [shape = 's32[1]{0}', space=sflag, size = 0x4, scoped, tag = 'scoped memory for _forward_jit.1']
    %12 = vsyncpa [#allocation3], 0
    // Predicated region
    $region2: #{_forward_jit.1} parent=1 // pred_check
      _
    $region3: #{_forward_jit.1} parent=1 // pred_check_branch
      %14 = sbr.rel (0) target = $region5
    $region4: #{_forward_jit.1} parent=1 // pred_region
      _
    $region5: #{_forward_jit.1} parent=1 // pred_fallthru
      _
    // Predicated region
    $region6: #{_forward_jit.1} parent=1 // pred_check
      _
    $region7: #{_forward_jit.1} parent=1 // pred_check_branch
      %16 = sbr.rel (0) target = $region9
    $region8: #{_forward_jit.1} parent=1 // pred_region
      _
    $region9: #{_forward_jit.1} parent=1 // pred_fallthru
      _
    // Predicated region
    $region10: #{_forward_jit.1} parent=1 // pred_check
      _
    $region11: #{_forward_jit.1} parent=1 // pred_check_branch
      %18 = sbr.rel (0) target = $region13
    $region12: #{_forward_jit.1} parent=1 // pred_region
      _
    $region13: #{_forward_jit.1} parent=1 // pred_fallthru
      _
    // Predicated region
    $region14: #{_forward_jit.1} parent=1 // pred_check
      _
    $region15: #{_forward_jit.1} parent=1 // pred_check_branch
      %20 = sbr.rel (0) target = $region17
    $region16: #{_forward_jit.1} parent=1 // pred_region
      _
    $region17: #{_forward_jit.1} parent=1 // pred_fallthru
      _
    // Predicated region
    $region18: #{_forward_jit.1} parent=1 // pred_check
      _
    $region19: #{_forward_jit.1} parent=1 // pred_check_branch
      %22 = sbr.rel (0) target = $region21
    $region20: #{_forward_jit.1} parent=1 // pred_region
      _
    $region21: #{_forward_jit.1} parent=1 // pred_fallthru
      _
    // Predicated region
    $region22: #{_forward_jit.1} parent=1 // pred_check
      _
    $region23: #{_forward_jit.1} parent=1 // pred_check_branch
      %24 = sbr.rel (0) target = $region25
    $region24: #{_forward_jit.1} parent=1 // pred_region
      _
    $region25: #{_forward_jit.1} parent=1 // pred_fallthru
      _
    // Predicated region
    $region26: #{_forward_jit.1} parent=1 // pred_check
      _
    $region27: #{_forward_jit.1} parent=1 // pred_check_branch
      %26 = sbr.rel (0) target = $region29
    $region28: #{_forward_jit.1} parent=1 // pred_region
      _
    $region29: #{_forward_jit.1} parent=1 // pred_fallthru
      _
    %v27 = vld [vmem:[%s0] sm:$0x3]
    %v28 = vld [vmem:[%s1] sm:$0xff]
    %v29 = vld [vmem:[%s1 + $0x8] sm:$0xff]
    %v30 = vld [vmem:[%s1 + $0x10] sm:$0xff]
    %v31 = vld [vmem:[%s1 + $0x18] sm:$0xff]
    %v32 = vld [vmem:[%s2] sm:$0xff]
    %v33 = vld [vmem:[%s2 + $0x8] sm:$0xff]
    %v34 = vld [vmem:[%s2 + $0x10] sm:$0xff]
    %v35 = vld [vmem:[%s2 + $0x18] sm:$0xff]
    %37 = vset.pattern.permute.xlu0 0
    %38 = vperm.xlu0 %37, %v32
    %v39 = vpop.permute.xlu0 %38
    %42 = vset.pattern.permute.xlu0 0
    %43 = vperm.xlu0 %42, %v33
    %v44 = vpop.permute.xlu0 %43
    %47 = vset.pattern.permute.xlu0 0
    %48 = vperm.xlu0 %47, %v34
    %v49 = vpop.permute.xlu0 %48
    %52 = vset.pattern.permute.xlu0 0
    %53 = vperm.xlu0 %52, %v35
    %v54 = vpop.permute.xlu0 %53
    %57 = vset.pattern.permute.xlu0 0
    %58 = vperm.xlu0 %57, %v28
    %v59 = vpop.permute.xlu0 %58
    %62 = vset.pattern.permute.xlu0 0
    %63 = vperm.xlu0 %62, %v29
    %v64 = vpop.permute.xlu0 %63
    %67 = vset.pattern.permute.xlu0 0
    %68 = vperm.xlu0 %67, %v30
    %v69 = vpop.permute.xlu0 %68
    %72 = vset.pattern.permute.xlu0 0
    %73 = vperm.xlu0 %72, %v31
    %v74 = vpop.permute.xlu0 %73
    %v76 = vlaneseq
    %v77 = vshrl.u32 %v76, 7
    %v78 = vsub.s32 0, %v77
    %v79 = vrot.slane %v27, %v78
    %v80 = vmul.f32 %v59, %v79
    %v81 = vmul.f32 %v64, %v79
    %v82 = vmul.f32 %v69, %v79
    %v83 = vmul.f32 %v74, %v79
    %v84 = vadd.f32 %v39, %v80
    %v85 = vadd.f32 %v44, %v81
    %v86 = vadd.f32 %v49, %v82
    %v87 = vadd.f32 %v54, %v83
    %88 = vset.pattern.permute.xlu0 1
    %89 = vperm.xlu0 %88, %v28
    %v90 = vpop.permute.xlu0 %89
    %92 = vset.pattern.permute.xlu0 1
    %93 = vperm.xlu0 %92, %v29
    %v94 = vpop.permute.xlu0 %93
    %96 = vset.pattern.permute.xlu0 1
    %97 = vperm.xlu0 %96, %v30
    %v98 = vpop.permute.xlu0 %97
    %100 = vset.pattern.permute.xlu0 1
    %101 = vperm.xlu0 %100, %v31
    %v102 = vpop.permute.xlu0 %101
    %v104 = vlaneseq
    %v105 = vshrl.u32 %v104, 7
    %v106 = vsub.s32 1, %v105
    %v107 = vrot.slane %v27, %v106
    %v108 = vmul.f32 %v90, %v107
    %v109 = vmul.f32 %v94, %v107
    %v110 = vmul.f32 %v98, %v107
    %v111 = vmul.f32 %v102, %v107
    %v112 = vadd.f32 %v84, %v108
    %v113 = vadd.f32 %v85, %v109
    %v114 = vadd.f32 %v86, %v110
    %v115 = vadd.f32 %v87, %v111
    %v116 = vmax.f32 %v112, 0.0
    %v117 = vmax.f32 %v113, 0.0
    %v118 = vmax.f32 %v114, 0.0
    %v119 = vmax.f32 %v115, 0.0
    %v120 = vld [vmem:[%s3] sm:$0xff]
    %v121 = vld [vmem:[%s3 + $0x8] sm:$0xff]
    %v122 = vld [vmem:[%s3 + $0x10] sm:$0xff]
    %v123 = vld [vmem:[%s3 + $0x18] sm:$0xff]
    %v124 = vld [vmem:[%s4] sm:$0xff]
    %v125 = vld [vmem:[%s4 + $0x8] sm:$0xff]
    %v126 = vld [vmem:[%s4 + $0x10] sm:$0xff]
    %v127 = vld [vmem:[%s4 + $0x18] sm:$0xff]
    %129 = vset.pattern.permute.xlu0 0
    %130 = vperm.xlu0 %129, %v124
    %v131 = vpop.permute.xlu0 %130
    %134 = vset.pattern.permute.xlu0 0
    %135 = vperm.xlu0 %134, %v125
    %v136 = vpop.permute.xlu0 %135
    %139 = vset.pattern.permute.xlu0 0
    %140 = vperm.xlu0 %139, %v126
    %v141 = vpop.permute.xlu0 %140
    %144 = vset.pattern.permute.xlu0 0
    %145 = vperm.xlu0 %144, %v127
    %v146 = vpop.permute.xlu0 %145
    %vm148 = vcmask 261120
    %v150 = vsel %vm148, %v120, 0
    %v153 = vsel %vm148, %v121, 0
    %v156 = vsel %vm148, %v122, 0
    %v159 = vsel %vm148, %v123, 0
    %161 = vmatprep.subr.mxu0 0.0
    %162 = vmatpush1.msra.mxu0 0.0
    %163 = vmatprep.subr.mxu0 0.0
    %164 = vmatpush1.msra.mxu0 0.0
    %165 = vmatprep.subr.mxu0 0.0
    %166 = vmatpush1.msra.mxu0 0.0
    %167 = vmatprep.subr.mxu0 0.0
    %168 = vmatpush1.msra.mxu0 0.0
    %169 = vmatprep.subr.mxu0 0.0
    %170 = vmatpush1.msra.mxu0 0.0
    %171 = vmatprep.subr.mxu0 0.0
    %172 = vmatpush1.msra.mxu0 0.0
    %173 = vmatprep.subr.mxu0 0.0
    %174 = vmatpush1.msra.mxu0 0.0
    %175 = vmatprep.subr.mxu0 0.0
    %176 = vmatpush1.msra.mxu0 0.0
    %177 = vmatprep.subr.mxu0 0.0
    %178 = vmatpush1.msra.mxu0 0.0
    %179 = vmatprep.subr.mxu0 0.0
    %180 = vmatpush1.msra.mxu0 0.0
    %181 = vmatprep.subr.mxu0 0.0
    %182 = vmatpush1.msra.mxu0 0.0
    %183 = vmatprep.subr.mxu0 0.0
    %184 = vmatpush1.msra.mxu0 0.0
    %185 = vmatprep.subr.mxu0 0.0
    %186 = vmatpush1.msra.mxu0 %v119
    %187 = vmatprep.subr.mxu0 0.0
    %188 = vmatpush1.msra.mxu0 %v118
    %189 = vmatprep.subr.mxu0 0.0
    %190 = vmatpush1.msra.mxu0 %v117
    %191 = vmatprep.subr.mxu0 0.0
    %192 = vmatpush1.msra.mxu0 %v116
    %193 = vmatprep.subr.mxu0 0.0
    %194 = vmatpush2.msra.mxu0 0.0
    %195 = vmatprep.subr.mxu0 0.0
    %196 = vmatpush2.msra.mxu0 0.0
    %197 = vmatprep.subr.mxu0 0.0
    %198 = vmatpush2.msra.mxu0 0.0
    %199 = vmatprep.subr.mxu0 0.0
    %200 = vmatpush2.msra.mxu0 0.0
    %201 = vmatprep.subr.mxu0 0.0
    %202 = vmatpush2.msra.mxu0 0.0
    %203 = vmatprep.subr.mxu0 0.0
    %204 = vmatpush2.msra.mxu0 0.0
    %205 = vmatprep.subr.mxu0 0.0
    %206 = vmatpush2.msra.mxu0 0.0
    %207 = vmatprep.subr.mxu0 0.0
    %208 = vmatpush2.msra.mxu0 0.0
    %209 = vmatprep.subr.mxu0 0.0
    %210 = vmatpush2.msra.mxu0 0.0
    %211 = vmatprep.subr.mxu0 0.0
    %212 = vmatpush2.msra.mxu0 0.0
    %213 = vmatprep.subr.mxu0 0.0
    %214 = vmatpush2.msra.mxu0 0.0
    %215 = vmatprep.subr.mxu0 0.0
    %216 = vmatpush2.msra.mxu0 0.0
    %217 = vmatprep.subr.mxu0 0.0
    %218 = vmatpush2.msra.mxu0 0.0
    %219 = vmatprep.subr.mxu0 0.0
    %220 = vmatpush2.msra.mxu0 0.0
    %221 = vmatprep.subr.mxu0 0.0
    %222 = vmatpush2.msra.mxu0 0.0
    %223 = vmatprep.subr.mxu0 0.0
    %224 = vmatpush2.msra.mxu0 0.0
    %225 = vmatprep.mubr.f32.mxu0 0.0
    %226 = vmatmul.mubr.f32.gmra.mxu0 %v150
    %v227 = vpop.f32.mrf.mxu0
    %v228 = vadd.f32 %v131, %v227
    %v229 = vpop.f32.mrf.mxu0
    %230 = vmatprep.mubr.f32.mxu0 0.0
    %231 = vmatmul.mubr.f32.gmra.mxu0 %v153
    %v232 = vpop.f32.mrf.mxu0
    %v233 = vadd.f32 %v136, %v232
    %v234 = vpop.f32.mrf.mxu0
    %235 = vmatprep.mubr.f32.mxu0 0.0
    %236 = vmatmul.mubr.f32.gmra.mxu0 %v156
    %v237 = vpop.f32.mrf.mxu0
    %v238 = vadd.f32 %v141, %v237
    %v239 = vpop.f32.mrf.mxu0
    %240 = vmatprep.mubr.f32.mxu0 0.0
    %241 = vmatmul.mubr.f32.gmra.mxu0 %v159
    %v242 = vpop.f32.mrf.mxu0
    %v243 = vadd.f32 %v146, %v242
    %v244 = vpop.f32.mrf.mxu0
    %245 = vdwg.mxu0
    %v246 = vmax.f32 %v228, 0.0
    %v247 = vmax.f32 %v233, 0.0
    %v248 = vmax.f32 %v238, 0.0
    %v249 = vmax.f32 %v243, 0.0
    %v250 = vld [vmem:[%s5] sm:$0xf]
    %v251 = vld [vmem:[%s6] sm:$0xf]
    %253 = vset.pattern.permute.xlu0 0
    %254 = vperm.xlu0 %253, %v251
    %v255 = vpop.permute.xlu0 %254
    %v258 = vsel %vm148, %v250, 0
    %260 = vmatprep.subr.mxu0 0.0
    %261 = vmatpush1.msra.mxu0 0.0
    %262 = vmatprep.subr.mxu0 0.0
    %263 = vmatpush1.msra.mxu0 0.0
    %264 = vmatprep.subr.mxu0 0.0
    %265 = vmatpush1.msra.mxu0 0.0
    %266 = vmatprep.subr.mxu0 0.0
    %267 = vmatpush1.msra.mxu0 0.0
    %268 = vmatprep.subr.mxu0 0.0
    %269 = vmatpush1.msra.mxu0 0.0
    %270 = vmatprep.subr.mxu0 0.0
    %271 = vmatpush1.msra.mxu0 0.0
    %272 = vmatprep.subr.mxu0 0.0
    %273 = vmatpush1.msra.mxu0 0.0
    %274 = vmatprep.subr.mxu0 0.0
    %275 = vmatpush1.msra.mxu0 0.0
    %276 = vmatprep.subr.mxu0 0.0
    %277 = vmatpush1.msra.mxu0 0.0
    %278 = vmatprep.subr.mxu0 0.0
    %279 = vmatpush1.msra.mxu0 0.0
    %280 = vmatprep.subr.mxu0 0.0
    %281 = vmatpush1.msra.mxu0 0.0
    %282 = vmatprep.subr.mxu0 0.0
    %283 = vmatpush1.msra.mxu0 0.0
    %284 = vmatprep.subr.mxu0 0.0
    %285 = vmatpush1.msra.mxu0 %v249
    %286 = vmatprep.subr.mxu0 0.0
    %287 = vmatpush1.msra.mxu0 %v248
    %288 = vmatprep.subr.mxu0 0.0
    %289 = vmatpush1.msra.mxu0 %v247
    %290 = vmatprep.subr.mxu0 0.0
    %291 = vmatpush1.msra.mxu0 %v246
    %292 = vmatprep.subr.mxu0 0.0
    %293 = vmatpush2.msra.mxu0 0.0
    %294 = vmatprep.subr.mxu0 0.0
    %295 = vmatpush2.msra.mxu0 0.0
    %296 = vmatprep.subr.mxu0 0.0
    %297 = vmatpush2.msra.mxu0 0.0
    %298 = vmatprep.subr.mxu0 0.0
    %299 = vmatpush2.msra.mxu0 0.0
    %300 = vmatprep.subr.mxu0 0.0
    %301 = vmatpush2.msra.mxu0 0.0
    %302 = vmatprep.subr.mxu0 0.0
    %303 = vmatpush2.msra.mxu0 0.0
    %304 = vmatprep.subr.mxu0 0.0
    %305 = vmatpush2.msra.mxu0 0.0
    %306 = vmatprep.subr.mxu0 0.0
    %307 = vmatpush2.msra.mxu0 0.0
    %308 = vmatprep.subr.mxu0 0.0
    %309 = vmatpush2.msra.mxu0 0.0
    %310 = vmatprep.subr.mxu0 0.0
    %311 = vmatpush2.msra.mxu0 0.0
    %312 = vmatprep.subr.mxu0 0.0
    %313 = vmatpush2.msra.mxu0 0.0
    %314 = vmatprep.subr.mxu0 0.0
    %315 = vmatpush2.msra.mxu0 0.0
    %316 = vmatprep.subr.mxu0 0.0
    %317 = vmatpush2.msra.mxu0 0.0
    %318 = vmatprep.subr.mxu0 0.0
    %319 = vmatpush2.msra.mxu0 0.0
    %320 = vmatprep.subr.mxu0 0.0
    %321 = vmatpush2.msra.mxu0 0.0
    %322 = vmatprep.subr.mxu0 0.0
    %323 = vmatpush2.msra.mxu0 0.0
    %324 = vmatprep.mubr.f32.mxu0 0.0
    %325 = vmatmul.mubr.f32.gmra.mxu0 %v258
    %v326 = vpop.f32.mrf.mxu0
    %v327 = vadd.f32 %v255, %v326
    %v328 = vpop.f32.mrf.mxu0
    %329 = vdwg.mxu0
    %v330 = vxor.u32 %v327, 2147483648
    %v331 = vmul.f32 %v330, 1.442695
    %v332 = vpow.pop %v331
    %v333 = vadd.f32 %v332, 1.0
    %v334 = vrcp.pop %v333
    %v335 = vmul.f32 1.0, %v334
    %336 = vst [vmem:[#allocation2] sm:$0xf] %v335
    // Predicated region
    $region30: #{_forward_jit.1} parent=1 // pred_check
      _
    $region31: #{_forward_jit.1} parent=1 // pred_check_branch
      %338 = sbr.rel (0) target = $region33
    $region32: #{_forward_jit.1} parent=1 // pred_region
      %s340 = ssub.s32 64, 64
      %341 = vsyncadd [#allocation3], %s340
      %s343 = sshll.u32 [#allocation2], 4
      %s344 = int_to_ptr.vmem [resolvable:$true] %s343
      %346 = dma.vmem_to_hbm [thread:$0]  %s344, 64, %s7, [#allocation3]
    $region33: #{_forward_jit.1} parent=1 // pred_fallthru
      _
    // Predicated region
    $region34: #{_forward_jit.1} parent=1 // pred_check
      _
    $region35: #{_forward_jit.1} parent=1 // pred_check_branch
      %348 = sbr.rel (0) target = $region37
    $region36: #{_forward_jit.1} parent=1 // pred_region
      %349 = dma.done [#allocation3], 64
    $region37: #{_forward_jit.1} parent=1 // pred_fallthru
      _
    %350 = vsyncpa [#allocation3], 1

</llo_original>
